<compile_context>
chip_gen: v7x
topology: tpu7x:2x2x1
jax: 0.10.0
libtpu: 0.0.40
codegen_flags: <defaults>
</compile_context>

<pallas_src>
import functools

import jax
import jax.numpy as jnp
from jax.experimental import pallas as pl
from jax.experimental.pallas import tpu as pltpu


def _round_up(x, m):
    return (x + m - 1) // m * m


# ----------------------------------------------------------------------------
# Pallas kernel: fused  out = relu(x @ W1 + b1) @ W2 + b2
# ----------------------------------------------------------------------------
def _pose_head_kernel(x_ref, w1_ref, b1_ref, w2_ref, b2_ref, o_ref):
    # First matmul on the MXU, f32 accumulation.
    h = jnp.dot(x_ref[...], w1_ref[...], preferred_element_type=jnp.float32)
    # Bias-add + ReLU stay in f32 on the VPU (cheap path on all generations).
    h = jnp.maximum(h + b1_ref[...], 0.0)
    # Second matmul; cast activations to the weight dtype (bf16 on v6e/v7x)
    # so the MXU runs at its narrow-dtype rate, accumulate in f32.
    o = jnp.dot(h.astype(w2_ref.dtype), w2_ref[...],
                preferred_element_type=jnp.float32)
    o_ref[...] = (o + b2_ref[...]).astype(o_ref.dtype)


def pose_head(embed_flat, w1, b1, w2, b2, *, tm=None, matmul_dtype=None,
              vmem_limit_bytes=64 * 1024 * 1024, single_buffer_weights=True):
    """to_pose MLP head: (M, E) -> (M, n_joints*3), fused in one Pallas kernel."""
    M, E = embed_flat.shape
    H = w1.shape[1]
    O = w2.shape[1]
    out_dtype = embed_flat.dtype

    # --- lane-pad output features to a multiple of 128 (zero padding). -------
    O_pad = _round_up(O, 128)
    if O_pad != O:
        w2 = jnp.pad(w2, ((0, 0), (0, O_pad - O)))
        b2 = jnp.pad(b2, ((0, 0), (0, O_pad - O)))

    # --- row tile: as large as the MXU wants (<=256), multiple of 8. ---------
    if tm is None:
        tm = min(256, _round_up(M, 8))
    tm = _round_up(tm, 8)
    M_pad = _round_up(M, tm)
    if M_pad != M:
        embed_flat = jnp.pad(embed_flat, ((0, M_pad - M), (0, 0)))

    # --- optionally narrow the matmul operands (bf16 on v6e / v7x). ----------
    if matmul_dtype is not None:
        embed_flat = embed_flat.astype(matmul_dtype)
        w1 = w1.astype(matmul_dtype)
        w2 = w2.astype(matmul_dtype)
    b1 = b1.astype(jnp.float32)
    b2 = b2.astype(jnp.float32)

    def _resident_spec(shape):
        # Constant index map -> block fetched once; request single buffering so
        # the resident weights do not burn a second VMEM buffer.
        kwargs = {}
        if single_buffer_weights:
            kwargs["pipeline_mode"] = pl.Buffered(1)
        return pl.BlockSpec(shape, lambda i: (0, 0), **kwargs)

    def _nbytes(a):
        return a.size * a.dtype.itemsize

    cost = pl.CostEstimate(
        flops=2 * M_pad * (E * H + H * O_pad),
        transcendentals=0,
        bytes_accessed=(_nbytes(embed_flat) + _nbytes(w1) + _nbytes(w2)
                        + _nbytes(b1) + _nbytes(b2)
                        + M_pad * O_pad * jnp.dtype(out_dtype).itemsize),
    )

    out = pl.pallas_call(
        _pose_head_kernel,
        out_shape=jax.ShapeDtypeStruct((M_pad, O_pad), out_dtype),
        grid_spec=pltpu.PrefetchScalarGridSpec(
            num_scalar_prefetch=0,
            grid=(M_pad // tm,),
            in_specs=[
                pl.BlockSpec((tm, E), lambda i: (i, 0)),   # x rows tile
                _resident_spec((E, H)),                    # W1 (resident)
                _resident_spec((1, H)),                    # b1
                _resident_spec((H, O_pad)),                # W2 (resident)
                _resident_spec((1, O_pad)),                # b2
            ],
            out_specs=pl.BlockSpec((tm, O_pad), lambda i: (i, 0)),
        ),
        compiler_params=pltpu.CompilerParams(
            dimension_semantics=("parallel",),
            vmem_limit_bytes=vmem_limit_bytes,
        ),
        cost_estimate=cost,
    )(embed_flat, w1, b1, w2, b2)

    # Slice the row / lane padding back off.
    return out[:M, :O]


# ----------------------------------------------------------------------------
# FineTuneBert forward
# ----------------------------------------------------------------------------
def bert_model_stub(x, poses, params):
    # TODO(synk): `bert_model` is an external module passed to __init__; no
    # definition exists in the spec, so a deterministic tanh projection stands
    # in for `bert_model(x, poses, return_embed=True)`.
    we, wp = params["we"], params["wp"]
    return jnp.tanh(jnp.einsum("bsf,fe->bse", x, we) +
                    jnp.einsum("bsp,pe->bse", poses, wp))


def fine_tune_bert_forward(x, poses, params, *, emb_size, n_joints,
                           matmul_dtype=None, single_buffer_weights=True):
    bsz = x.shape[0]
    final_embed = bert_model_stub(x, poses, params)            # (bsz, seq, emb)
    flat = final_embed.reshape(-1, emb_size)                   # (bsz*seq, emb)
    pose_out = pose_head(flat, params["w1"], params["b1"],
                         params["w2"], params["b2"],
                         matmul_dtype=matmul_dtype,
                         single_buffer_weights=single_buffer_weights)
    pose_out = pose_out.reshape(bsz, -1, n_joints * 3)
    return pose_out, final_embed


# ----------------------------------------------------------------------------
# Deterministic parameter init + run
# ----------------------------------------------------------------------------
def init_params(key, in_dim, pose_dim, emb_size, hidden, n_joints):
    ks = jax.random.split(key, 6)
    scale = 0.02
    return {
        "we": scale * jax.random.normal(ks[0], (in_dim, emb_size), jnp.float32),
        "wp": scale * jax.random.normal(ks[1], (pose_dim, emb_size), jnp.float32),
        "w1": scale * jax.random.normal(ks[2], (emb_size, hidden), jnp.float32),
        "b1": scale * jax.random.normal(ks[3], (1, hidden), jnp.float32),
        "w2": scale * jax.random.normal(ks[4], (hidden, n_joints * 3), jnp.float32),
        "b2": scale * jax.random.normal(ks[5], (1, n_joints * 3), jnp.float32),
    }


if __name__ == "__main__":
    # Small shapes consistent with the module's forward.
    bsz, seq = 2, 8
    in_dim = 64          # raw input feature dim consumed by the (stub) bert model
    n_joints = 16
    pose_dim = n_joints * 3
    emb_size = 256       # scaled-down emb_size (module default 2048)
    hidden = 128         # scaled-down hidden   (module default 1024)

    key = jax.random.PRNGKey(0)
    kx, kp, kparam = jax.random.split(key, 3)
    x = jax.random.normal(kx, (bsz, seq, in_dim), jnp.float32)
    poses = jax.random.normal(kp, (bsz, seq, pose_dim), jnp.float32)
    params = init_params(kparam, in_dim, pose_dim, emb_size, hidden, n_joints)

    def run(single_buffer, matmul_dtype=None):
        fwd = jax.jit(functools.partial(
            fine_tune_bert_forward, emb_size=emb_size, n_joints=n_joints,
            matmul_dtype=matmul_dtype, single_buffer_weights=single_buffer))
        out = fwd(x, poses, params)
        jax.block_until_ready(out)
        return out

    # f32 path (strict reference check).
    try:
        pose_out, final_embed = run(True)
    except Exception:
        # TODO(synk): this jax build rejected pl.Buffered(1) single-buffering of
        # the resident weights; fall back to the default pipeline buffering.
        pose_out, final_embed = run(False)

    flat = final_embed.reshape(-1, emb_size)
    ref = (jnp.maximum(flat @ params["w1"] + params["b1"], 0.0)
           @ params["w2"] + params["b2"]).reshape(bsz, -1, n_joints * 3)
    assert pose_out.shape == (bsz, seq, n_joints * 3)
    assert final_embed.shape == (bsz, seq, emb_size)
    assert jnp.allclose(pose_out, ref, atol=1e-5, rtol=1e-5)

    # bf16 matmul-operand path (recommended on v6e / v7x); f32 epilogue.
    try:
        pose_bf16, _ = run(True, matmul_dtype=jnp.bfloat16)
    except Exception:
        pose_bf16, _ = run(False, matmul_dtype=jnp.bfloat16)
    assert pose_bf16.shape == (bsz, seq, n_joints * 3)
    assert jnp.allclose(pose_bf16, ref, atol=1e-2, rtol=1e-2)

    print("KERNEL_OK")
</pallas_src>

<mosaic_0001>
module attributes {stable_mosaic.version = 11 : i64} {
  func.func @_pose_head_kernel(%arg0: i32, %arg1: memref<16x256xf32, #tpu.memory_space<vmem>>, %arg2: memref<256x128xf32, #tpu.memory_space<vmem>>, %arg3: memref<1x128xf32, #tpu.memory_space<vmem>>, %arg4: memref<128x128xf32, #tpu.memory_space<vmem>>, %arg5: memref<1x128xf32, #tpu.memory_space<vmem>>, %arg6: memref<16x128xf32, #tpu.memory_space<vmem>>) attributes {dimension_semantics = [#tpu.dimension_semantics<parallel>], iteration_bounds = array<i64: 1>, scalar_prefetch = 0 : i64, scratch_operands = 0 : i64, tpu.core_type = #tpu.core_type<tc>, window_params = [{transform_indices = @transform_0, window_bounds = array<i64: 16, 256>}, {pipeline_mode = #tpu.pipeline_mode<synchronous>, transform_indices = @transform_1, window_bounds = array<i64: 256, 128>}, {pipeline_mode = #tpu.pipeline_mode<synchronous>, transform_indices = @transform_2, window_bounds = array<i64: 1, 128>}, {pipeline_mode = #tpu.pipeline_mode<synchronous>, transform_indices = @transform_3, window_bounds = array<i64: 128, 128>}, {pipeline_mode = #tpu.pipeline_mode<synchronous>, transform_indices = @transform_4, window_bounds = array<i64: 1, 128>}, {transform_indices = @transform_5, window_bounds = array<i64: 16, 128>}]} {
    %c0 = arith.constant 0 : index
    %c0_0 = arith.constant 0 : index
    %0 = vector.load %arg1[%c0, %c0_0] : memref<16x256xf32, #tpu.memory_space<vmem>>, vector<16x256xf32>
    %c0_1 = arith.constant 0 : index
    %c0_2 = arith.constant 0 : index
    %1 = vector.load %arg2[%c0_1, %c0_2] : memref<256x128xf32, #tpu.memory_space<vmem>>, vector<256x128xf32>
    %cst = arith.constant dense<0.000000e+00> : vector<16x128xf32>
    %2 = tpu.matmul %0, %1, %cst {dimension_numbers = #tpu.dot_dimension_numbers<[1], [0], [0], [1], [0, 0, 1, 1], [], []>} : vector<16x256xf32>, vector<256x128xf32>, vector<16x128xf32> -> vector<16x128xf32>
    %c0_3 = arith.constant 0 : index
    %c0_4 = arith.constant 0 : index
    %3 = vector.load %arg3[%c0_3, %c0_4] : memref<1x128xf32, #tpu.memory_space<vmem>>, vector<1x128xf32>
    %4 = vector.broadcast %3 : vector<1x128xf32> to vector<16x128xf32>
    %5 = arith.addf %2, %4 : vector<16x128xf32>
    %cst_5 = arith.constant 0.000000e+00 : f32
    %6 = vector.broadcast %cst_5 : f32 to vector<16x128xf32>
    %7 = arith.maximumf %5, %6 : vector<16x128xf32>
    %c0_6 = arith.constant 0 : index
    %c0_7 = arith.constant 0 : index
    %8 = vector.load %arg4[%c0_6, %c0_7] : memref<128x128xf32, #tpu.memory_space<vmem>>, vector<128x128xf32>
    %cst_8 = arith.constant dense<0.000000e+00> : vector<16x128xf32>
    %9 = tpu.matmul %7, %8, %cst_8 {dimension_numbers = #tpu.dot_dimension_numbers<[1], [0], [0], [1], [0, 0, 1, 1], [], []>} : vector<16x128xf32>, vector<128x128xf32>, vector<16x128xf32> -> vector<16x128xf32>
    %c0_9 = arith.constant 0 : index
    %c0_10 = arith.constant 0 : index
    %10 = vector.load %arg5[%c0_9, %c0_10] : memref<1x128xf32, #tpu.memory_space<vmem>>, vector<1x128xf32>
    %11 = vector.broadcast %10 : vector<1x128xf32> to vector<16x128xf32>
    %12 = arith.addf %9, %11 : vector<16x128xf32>
    %c0_11 = arith.constant 0 : index
    %c0_12 = arith.constant 0 : index
    %13 = vector.load %arg6[%c0_11, %c0_12] : memref<16x128xf32, #tpu.memory_space<vmem>>, vector<16x128xf32>
    tpu.vector_store %arg6[%c0_11, %c0_12], %12 {strides = array<i32>} : memref<16x128xf32, #tpu.memory_space<vmem>>, vector<16x128xf32>,
    return
  }
  func.func @transform_0(%arg0: i32) -> (i32, i32) {
    %c0_i32 = arith.constant 0 : i32
    %c0_i32_0 = arith.constant 0 : i32
    return %arg0, %c0_i32 : i32, i32
  }
  func.func @transform_1(%arg0: i32) -> (i32, i32) {
    %c0_i32 = arith.constant 0 : i32
    %c0_i32_0 = arith.constant 0 : i32
    %c0_i32_1 = arith.constant 0 : i32
    return %c0_i32, %c0_i32_0 : i32, i32
  }
  func.func @transform_2(%arg0: i32) -> (i32, i32) {
    %c0_i32 = arith.constant 0 : i32
    %c0_i32_0 = arith.constant 0 : i32
    %c0_i32_1 = arith.constant 0 : i32
    return %c0_i32, %c0_i32_0 : i32, i32
  }
  func.func @transform_3(%arg0: i32) -> (i32, i32) {
    %c0_i32 = arith.constant 0 : i32
    %c0_i32_0 = arith.constant 0 : i32
    %c0_i32_1 = arith.constant 0 : i32
    return %c0_i32, %c0_i32_0 : i32, i32
  }
  func.func @transform_4(%arg0: i32) -> (i32, i32) {
    %c0_i32 = arith.constant 0 : i32
    %c0_i32_0 = arith.constant 0 : i32
    %c0_i32_1 = arith.constant 0 : i32
    return %c0_i32, %c0_i32_0 : i32, i32
  }
  func.func @transform_5(%arg0: i32) -> (i32, i32) {
    %c0_i32 = arith.constant 0 : i32
    %c0_i32_0 = arith.constant 0 : i32
    return %arg0, %c0_i32 : i32, i32
  }
}

module attributes {stable_mosaic.version = 11 : i64} {
  func.func @_pose_head_kernel(%arg0: i32, %arg1: memref<16x256xf32, #tpu.memory_space<vmem>>, %arg2: memref<256x128xf32, #tpu.memory_space<vmem>>, %arg3: memref<1x128xf32, #tpu.memory_space<vmem>>, %arg4: memref<128x128xf32, #tpu.memory_space<vmem>>, %arg5: memref<1x128xf32, #tpu.memory_space<vmem>>, %arg6: memref<16x128xf32, #tpu.memory_space<vmem>>) attributes {dimension_semantics = [#tpu.dimension_semantics<parallel>], iteration_bounds = array<i64: 1>, scalar_prefetch = 0 : i64, scratch_operands = 0 : i64, tpu.core_type = #tpu.core_type<tc>, window_params = [{transform_indices = @transform_0, window_bounds = array<i64: 16, 256>}, {pipeline_mode = #tpu.pipeline_mode<synchronous>, transform_indices = @transform_1, window_bounds = array<i64: 256, 128>}, {pipeline_mode = #tpu.pipeline_mode<synchronous>, transform_indices = @transform_2, window_bounds = array<i64: 1, 128>}, {pipeline_mode = #tpu.pipeline_mode<synchronous>, transform_indices = @transform_3, window_bounds = array<i64: 128, 128>}, {pipeline_mode = #tpu.pipeline_mode<synchronous>, transform_indices = @transform_4, window_bounds = array<i64: 1, 128>}, {transform_indices = @transform_5, window_bounds = array<i64: 16, 128>}]} {
    %c0 = arith.constant 0 : index
    %c0_0 = arith.constant 0 : index
    %0 = vector.load %arg1[%c0, %c0_0] : memref<16x256xf32, #tpu.memory_space<vmem>>, vector<16x256xf32>
    %c0_1 = arith.constant 0 : index
    %c0_2 = arith.constant 0 : index
    %1 = vector.load %arg2[%c0_1, %c0_2] : memref<256x128xf32, #tpu.memory_space<vmem>>, vector<256x128xf32>
    %cst = arith.constant dense<0.000000e+00> : vector<16x128xf32>
    %2 = tpu.matmul %0, %1, %cst {dimension_numbers = #tpu.dot_dimension_numbers<[1], [0], [0], [1], [0, 0, 1, 1], [], []>} : vector<16x256xf32>, vector<256x128xf32>, vector<16x128xf32> -> vector<16x128xf32>
    %c0_3 = arith.constant 0 : index
    %c0_4 = arith.constant 0 : index
    %3 = vector.load %arg3[%c0_3, %c0_4] : memref<1x128xf32, #tpu.memory_space<vmem>>, vector<1x128xf32>
    %4 = vector.broadcast %3 : vector<1x128xf32> to vector<16x128xf32>
    %5 = arith.addf %2, %4 : vector<16x128xf32>
    %cst_5 = arith.constant 0.000000e+00 : f32
    %6 = vector.broadcast %cst_5 : f32 to vector<16x128xf32>
    %7 = arith.maximumf %5, %6 : vector<16x128xf32>
    %c0_6 = arith.constant 0 : index
    %c0_7 = arith.constant 0 : index
    %8 = vector.load %arg4[%c0_6, %c0_7] : memref<128x128xf32, #tpu.memory_space<vmem>>, vector<128x128xf32>
    %cst_8 = arith.constant dense<0.000000e+00> : vector<16x128xf32>
    %9 = tpu.matmul %7, %8, %cst_8 {dimension_numbers = #tpu.dot_dimension_numbers<[1], [0], [0], [1], [0, 0, 1, 1], [], []>} : vector<16x128xf32>, vector<128x128xf32>, vector<16x128xf32> -> vector<16x128xf32>
    %c0_9 = arith.constant 0 : index
    %c0_10 = arith.constant 0 : index
    %10 = vector.load %arg5[%c0_9, %c0_10] : memref<1x128xf32, #tpu.memory_space<vmem>>, vector<1x128xf32>
    %11 = vector.broadcast %10 : vector<1x128xf32> to vector<16x128xf32>
    %12 = arith.addf %9, %11 : vector<16x128xf32>
    %c0_11 = arith.constant 0 : index
    %c0_12 = arith.constant 0 : index
    %13 = vector.load %arg6[%c0_11, %c0_12] : memref<16x128xf32, #tpu.memory_space<vmem>>, vector<16x128xf32>
    tpu.vector_store %arg6[%c0_11, %c0_12], %12 {strides = array<i32>} : memref<16x128xf32, #tpu.memory_space<vmem>>, vector<16x128xf32>,
    return
  }
  func.func @transform_0(%arg0: i32) -> (i32, i32) {
    %c0_i32 = arith.constant 0 : i32
    %c0_i32_0 = arith.constant 0 : i32
    return %arg0, %c0_i32 : i32, i32
  }
  func.func @transform_1(%arg0: i32) -> (i32, i32) {
    %c0_i32 = arith.constant 0 : i32
    %c0_i32_0 = arith.constant 0 : i32
    %c0_i32_1 = arith.constant 0 : i32
    return %c0_i32, %c0_i32_0 : i32, i32
  }
  func.func @transform_2(%arg0: i32) -> (i32, i32) {
    %c0_i32 = arith.constant 0 : i32
    %c0_i32_0 = arith.constant 0 : i32
    %c0_i32_1 = arith.constant 0 : i32
    return %c0_i32, %c0_i32_0 : i32, i32
  }
  func.func @transform_3(%arg0: i32) -> (i32, i32) {
    %c0_i32 = arith.constant 0 : i32
    %c0_i32_0 = arith.constant 0 : i32
    %c0_i32_1 = arith.constant 0 : i32
    return %c0_i32, %c0_i32_0 : i32, i32
  }
  func.func @transform_4(%arg0: i32) -> (i32, i32) {
    %c0_i32 = arith.constant 0 : i32
    %c0_i32_0 = arith.constant 0 : i32
    %c0_i32_1 = arith.constant 0 : i32
    return %c0_i32, %c0_i32_0 : i32, i32
  }
  func.func @transform_5(%arg0: i32) -> (i32, i32) {
    %c0_i32 = arith.constant 0 : i32
    %c0_i32_0 = arith.constant 0 : i32
    return %arg0, %c0_i32 : i32, i32
  }
}

</mosaic_0001>

<llo_original>
// kernel: fine_tune_bert_forward.1
$region0: #{fine_tune_bert_forward.1}
  #allocation0 [shape = 'u32[]', space=smem, size = 0x4, offset = 0x4, fixed_abs, tag = 'smem constant byte address 0x4 - core index']
  #allocation1 [shape = 'u32[144,128]{1,0:T(1,128)}', space=vmem, size = 0x12000, scoped, tag = 'internal scratch']
  %s0 = inlined_call_operand.hbm [shape: f32[16,256], index: 0, kind: input, shape index: {}]
  %s1 = inlined_call_operand.hbm [shape: f32[256,128], index: 1, kind: input, shape index: {}]
  %s2 = inlined_call_operand.hbm [shape: f32[1,128], index: 2, kind: input, shape index: {}]
  %s3 = inlined_call_operand.hbm [shape: f32[128,128], index: 3, kind: input, shape index: {}]
  %s4 = inlined_call_operand.hbm [shape: f32[1,128], index: 4, kind: input, shape index: {}]
  %s5 = inlined_call_operand.hbm [shape: f32[16,128], index: 5, kind: output, shape index: {}]
  %s6 = sld [smem:[#allocation0]]
  $region50: #{fine_tune_bert_forward.1} parent=0
    _
  %s8 = ssub.s32 1, %s6
  %s9 = scalar_select 0, %s8, %s6
  $region1: #{fine_tune_bert_forward.1} parent=0
    #allocation2 [shape = 'u8[16384]{0}', space=vmem, size = 0x4000, scoped, tag = 'input window, operand 0, single buffered']
    #allocation3 [shape = 's32[1]{0}', space=sflag, size = 0x4, scoped, tag = 'scoped memory for fine_tune_bert_forward.1']
    #allocation4 [shape = 's32[1]{0}', space=sflag, size = 0x4, scoped, tag = 'scoped memory for fine_tune_bert_forward.1']
    #allocation5 [shape = 'u8[131072]{0}', space=vmem, size = 0x20000, scoped, tag = 'input window, operand 1, single buffered']
    #allocation6 [shape = 's32[1]{0}', space=sflag, size = 0x4, scoped, tag = 'scoped memory for fine_tune_bert_forward.1']
    #allocation7 [shape = 'u8[512]{0}', space=vmem, size = 0x400, scoped, tag = 'input window, operand 2, single buffered']
    #allocation8 [shape = 'u8[65536]{0}', space=vmem, size = 0x10000, scoped, tag = 'input window, operand 3, single buffered']
    #allocation9 [shape = 's32[1]{0}', space=sflag, size = 0x4, scoped, tag = 'scoped memory for fine_tune_bert_forward.1']
    #allocation10 [shape = 'u8[512]{0}', space=vmem, size = 0x400, scoped, tag = 'input window, operand 4, single buffered']
    #allocation11 [shape = 'u8[8192]{0}', space=vmem, size = 0x2000, scoped, tag = 'output window, operand 0, single buffered']
    %10 = vsyncpa [#allocation3], 0
    %11 = vsyncpa [#allocation6], 0
    %12 = vsyncpa [#allocation9], 0
    %13 = vsyncpa [#allocation4], 0
    // Predicated region
    $region2: #{fine_tune_bert_forward.1} parent=1 // pred_check
      _
    $region3: #{fine_tune_bert_forward.1} parent=1 // pred_check_branch
      %15 = sbr.rel (0) target = $region5
    $region4: #{fine_tune_bert_forward.1} parent=1 // pred_region
      %s17 = ssub.s32 512, 512
      %18 = vsyncadd [#allocation3], %s17
      %s19 = sshll.u32 [#allocation2], 4
      %s20 = int_to_ptr.vmem [resolvable:$true] %s19
      %25 = dma.hbm_to_vmem [thread:$0]  %s0, 512, %s20, [#allocation3], 256, 256, 16
    $region5: #{fine_tune_bert_forward.1} parent=1 // pred_fallthru
      _
    // Predicated region
    $region6: #{fine_tune_bert_forward.1} parent=1 // pred_check
      _
    $region7: #{fine_tune_bert_forward.1} parent=1 // pred_check_branch
      %27 = sbr.rel (0) target = $region9
    $region8: #{fine_tune_bert_forward.1} parent=1 // pred_region
      %s29 = ssub.s32 4096, 4096
      %30 = vsyncadd [#allocation6], %s29
      %s31 = sshll.u32 [#allocation5], 4
      %s32 = int_to_ptr.vmem [resolvable:$true] %s31
      %37 = dma.hbm_to_vmem [thread:$0]  %s1, 4096, %s32, [#allocation6], 128, 128, 8
    $region9: #{fine_tune_bert_forward.1} parent=1 // pred_fallthru
      _
    // Predicated region
    $region10: #{fine_tune_bert_forward.1} parent=1 // pred_check
      _
    $region11: #{fine_tune_bert_forward.1} parent=1 // pred_check_branch
      %39 = sbr.rel (0) target = $region13
    $region12: #{fine_tune_bert_forward.1} parent=1 // pred_region
      %s41 = ssub.s32 16, 16
      %42 = vsyncadd [#allocation6], %s41
      %s44 = sshll.u32 [#allocation7], 4
      %s45 = int_to_ptr.vmem [resolvable:$true] %s44
      %47 = dma.hbm_to_vmem [thread:$0]  %s2, 16, %s45, [#allocation6]
    $region13: #{fine_tune_bert_forward.1} parent=1 // pred_fallthru
      _
    // Predicated region
    $region14: #{fine_tune_bert_forward.1} parent=1 // pred_check
      _
    $region15: #{fine_tune_bert_forward.1} parent=1 // pred_check_branch
      %49 = sbr.rel (0) target = $region17
    $region16: #{fine_tune_bert_forward.1} parent=1 // pred_region
      %s51 = ssub.s32 2048, 2048
      %52 = vsyncadd [#allocation9], %s51
      %s53 = sshll.u32 [#allocation8], 4
      %s54 = int_to_ptr.vmem [resolvable:$true] %s53
      %59 = dma.hbm_to_vmem [thread:$0]  %s3, 2048, %s54, [#allocation9], 128, 128, 8
    $region17: #{fine_tune_bert_forward.1} parent=1 // pred_fallthru
      _
    // Predicated region
    $region18: #{fine_tune_bert_forward.1} parent=1 // pred_check
      _
    $region19: #{fine_tune_bert_forward.1} parent=1 // pred_check_branch
      %61 = sbr.rel (0) target = $region21
    $region20: #{fine_tune_bert_forward.1} parent=1 // pred_region
      %s63 = ssub.s32 16, 16
      %64 = vsyncadd [#allocation9], %s63
      %s66 = sshll.u32 [#allocation10], 4
      %s67 = int_to_ptr.vmem [resolvable:$true] %s66
      %69 = dma.hbm_to_vmem [thread:$0]  %s4, 16, %s67, [#allocation9]
    $region21: #{fine_tune_bert_forward.1} parent=1 // pred_fallthru
      _
    // Predicated region
    $region22: #{fine_tune_bert_forward.1} parent=1 // pred_check
      _
    $region23: #{fine_tune_bert_forward.1} parent=1 // pred_check_branch
      %71 = sbr.rel (0) target = $region25
    $region24: #{fine_tune_bert_forward.1} parent=1 // pred_region
      %72 = dma.done [#allocation3], 512
    $region25: #{fine_tune_bert_forward.1} parent=1 // pred_fallthru
      _
    // Predicated region
    $region26: #{fine_tune_bert_forward.1} parent=1 // pred_check
      _
    $region27: #{fine_tune_bert_forward.1} parent=1 // pred_check_branch
      %74 = sbr.rel (0) target = $region29
    $region28: #{fine_tune_bert_forward.1} parent=1 // pred_region
      %75 = dma.done [#allocation6], 4096
    $region29: #{fine_tune_bert_forward.1} parent=1 // pred_fallthru
      _
    // Predicated region
    $region30: #{fine_tune_bert_forward.1} parent=1 // pred_check
      _
    $region31: #{fine_tune_bert_forward.1} parent=1 // pred_check_branch
      %77 = sbr.rel (0) target = $region33
    $region32: #{fine_tune_bert_forward.1} parent=1 // pred_region
      %78 = dma.done [#allocation6], 16
    $region33: #{fine_tune_bert_forward.1} parent=1 // pred_fallthru
      _
    // Predicated region
    $region34: #{fine_tune_bert_forward.1} parent=1 // pred_check
      _
    $region35: #{fine_tune_bert_forward.1} parent=1 // pred_check_branch
      %80 = sbr.rel (0) target = $region37
    $region36: #{fine_tune_bert_forward.1} parent=1 // pred_region
      %81 = dma.done [#allocation9], 2048
    $region37: #{fine_tune_bert_forward.1} parent=1 // pred_fallthru
      _
    // Predicated region
    $region38: #{fine_tune_bert_forward.1} parent=1 // pred_check
      _
    $region39: #{fine_tune_bert_forward.1} parent=1 // pred_check_branch
      %83 = sbr.rel (0) target = $region41
    $region40: #{fine_tune_bert_forward.1} parent=1 // pred_region
      %84 = dma.done [#allocation9], 16
    $region41: #{fine_tune_bert_forward.1} parent=1 // pred_fallthru
      _
    %v85 = vld [vmem:[#allocation2] sm:$0xff]
    %v86 = vld [vmem:[#allocation2 + $0x8] sm:$0xff]
    %v87 = vld [vmem:[#allocation2 + $0x10] sm:$0xff]
    %v88 = vld [vmem:[#allocation2 + $0x18] sm:$0xff]
    %v89 = vld [vmem:[#allocation5] sm:$0xff]
    %v90 = vld [vmem:[#allocation5 + $0x8] sm:$0xff]
    %v91 = vld [vmem:[#allocation5 + $0x10] sm:$0xff]
    %v92 = vld [vmem:[#allocation5 + $0x18] sm:$0xff]
    %v93 = vld [vmem:[#allocation5 + $0x20] sm:$0xff]
    %v94 = vld [vmem:[#allocation5 + $0x28] sm:$0xff]
    %v95 = vld [vmem:[#allocation5 + $0x30] sm:$0xff]
    %v96 = vld [vmem:[#allocation5 + $0x38] sm:$0xff]
    %v97 = vld [vmem:[#allocation5 + $0x40] sm:$0xff]
    %v98 = vld [vmem:[#allocation5 + $0x48] sm:$0xff]
    %v99 = vld [vmem:[#allocation5 + $0x50] sm:$0xff]
    %v100 = vld [vmem:[#allocation5 + $0x58] sm:$0xff]
    %v101 = vld [vmem:[#allocation5 + $0x60] sm:$0xff]
    %v102 = vld [vmem:[#allocation5 + $0x68] sm:$0xff]
    %v103 = vld [vmem:[#allocation5 + $0x70] sm:$0xff]
    %v104 = vld [vmem:[#allocation5 + $0x78] sm:$0xff]
    %v105 = vld [vmem:[#allocation5 + $0x80] sm:$0xff]
    %v106 = vld [vmem:[#allocation5 + $0x88] sm:$0xff]
    %v107 = vld [vmem:[#allocation5 + $0x90] sm:$0xff]
    %v108 = vld [vmem:[#allocation5 + $0x98] sm:$0xff]
    %v109 = vld [vmem:[#allocation5 + $0xa0] sm:$0xff]
    %v110 = vld [vmem:[#allocation5 + $0xa8] sm:$0xff]
    %v111 = vld [vmem:[#allocation5 + $0xb0] sm:$0xff]
    %v112 = vld [vmem:[#allocation5 + $0xb8] sm:$0xff]
    %v113 = vld [vmem:[#allocation5 + $0xc0] sm:$0xff]
    %v114 = vld [vmem:[#allocation5 + $0xc8] sm:$0xff]
    %v115 = vld [vmem:[#allocation5 + $0xd0] sm:$0xff]
    %v116 = vld [vmem:[#allocation5 + $0xd8] sm:$0xff]
    %v117 = vld [vmem:[#allocation5 + $0xe0] sm:$0xff]
    %v118 = vld [vmem:[#allocation5 + $0xe8] sm:$0xff]
    %v119 = vld [vmem:[#allocation5 + $0xf0] sm:$0xff]
    %v120 = vld [vmem:[#allocation5 + $0xf8] sm:$0xff]
    %v121 = vld [vmem:[#allocation7] sm:$0x1]
    %v123 = vlaneseq
    %v124 = vshrl.u32 %v123, 7
    %v125 = vsub.s32 0, %v124
    %v126 = vrot.slane %v121, %v125
    %128 = vmatprep.subr.mxu0 0.0
    %129 = vmatpush1.msra.mxu0 %v89
    %130 = vmatprep.subr.mxu0 0.0
    %131 = vmatpush1.msra.mxu0 %v90
    %132 = vmatprep.subr.mxu0 0.0
    %133 = vmatpush1.msra.mxu0 %v91
    %134 = vmatprep.subr.mxu0 0.0
    %135 = vmatpush1.msra.mxu0 %v92
    %136 = vmatprep.subr.mxu0 0.0
    %137 = vmatpush1.msra.mxu0 %v93
    %138 = vmatprep.subr.mxu0 0.0
    %139 = vmatpush1.msra.mxu0 %v94
    %140 = vmatprep.subr.mxu0 0.0
    %141 = vmatpush1.msra.mxu0 %v95
    %142 = vmatprep.subr.mxu0 0.0
    %143 = vmatpush1.msra.mxu0 %v96
    %144 = vmatprep.subr.mxu0 0.0
    %145 = vmatpush1.msra.mxu0 %v97
    %146 = vmatprep.subr.mxu0 0.0
    %147 = vmatpush1.msra.mxu0 %v98
    %148 = vmatprep.subr.mxu0 0.0
    %149 = vmatpush1.msra.mxu0 %v99
    %150 = vmatprep.subr.mxu0 0.0
    %151 = vmatpush1.msra.mxu0 %v100
    %152 = vmatprep.subr.mxu0 0.0
    %153 = vmatpush1.msra.mxu0 %v101
    %154 = vmatprep.subr.mxu0 0.0
    %155 = vmatpush1.msra.mxu0 %v102
    %156 = vmatprep.subr.mxu0 0.0
    %157 = vmatpush1.msra.mxu0 %v103
    %158 = vmatprep.subr.mxu0 0.0
    %159 = vmatpush1.msra.mxu0 %v104
    %160 = vmatprep.subr.mxu0 0.0
    %161 = vmatpush1.msra.mxu0 %v105
    %162 = vmatprep.subr.mxu0 0.0
    %163 = vmatpush1.msra.mxu0 %v106
    %164 = vmatprep.subr.mxu0 0.0
    %165 = vmatpush1.msra.mxu0 %v107
    %166 = vmatprep.subr.mxu0 0.0
    %167 = vmatpush1.msra.mxu0 %v108
    %168 = vmatprep.subr.mxu0 0.0
    %169 = vmatpush1.msra.mxu0 %v109
    %170 = vmatprep.subr.mxu0 0.0
    %171 = vmatpush1.msra.mxu0 %v110
    %172 = vmatprep.subr.mxu0 0.0
    %173 = vmatpush1.msra.mxu0 %v111
    %174 = vmatprep.subr.mxu0 0.0
    %175 = vmatpush1.msra.mxu0 %v112
    %176 = vmatprep.subr.mxu0 0.0
    %177 = vmatpush1.msra.mxu0 %v113
    %178 = vmatprep.subr.mxu0 0.0
    %179 = vmatpush1.msra.mxu0 %v114
    %180 = vmatprep.subr.mxu0 0.0
    %181 = vmatpush1.msra.mxu0 %v115
    %182 = vmatprep.subr.mxu0 0.0
    %183 = vmatpush1.msra.mxu0 %v116
    %184 = vmatprep.subr.mxu0 0.0
    %185 = vmatpush1.msra.mxu0 %v117
    %186 = vmatprep.subr.mxu0 0.0
    %187 = vmatpush1.msra.mxu0 %v118
    %188 = vmatprep.subr.mxu0 0.0
    %189 = vmatpush1.msra.mxu0 %v119
    %190 = vmatprep.subr.mxu0 0.0
    %191 = vmatpush1.msra.mxu0 %v120
    %192 = vmatprep.mubr.f32.mxu0 %v86
    %193 = vmatmul.mubr.f32.gmra.mrb[0].mxu0 %v85
    %v194 = vpop.f32.mrb[0].mxu0
    %v195 = vadd.f32 %v126, %v194
    %v196 = vpop.f32.mrb[0].mxu0
    %197 = vmatprep.mubr.f32.mxu0 %v88
    %198 = vmatmul.mubr.f32.gmra.mrb[0].mxu0 %v87
    %v199 = vpop.f32.mrb[0].mxu0
    %v200 = vadd.f32 %v126, %v199
    %v201 = vpop.f32.mrb[0].mxu0
    %202 = vdwg.mxu0
    %v203 = vmax.f32 %v195, 0.0
    %v204 = vmax.f32 %v200, 0.0
    %v205 = vld [vmem:[#allocation8] sm:$0xff]
    %v206 = vld [vmem:[#allocation8 + $0x8] sm:$0xff]
    %v207 = vld [vmem:[#allocation8 + $0x10] sm:$0xff]
    %v208 = vld [vmem:[#allocation8 + $0x18] sm:$0xff]
    %v209 = vld [vmem:[#allocation8 + $0x20] sm:$0xff]
    %v210 = vld [vmem:[#allocation8 + $0x28] sm:$0xff]
    %v211 = vld [vmem:[#allocation8 + $0x30] sm:$0xff]
    %v212 = vld [vmem:[#allocation8 + $0x38] sm:$0xff]
    %v213 = vld [vmem:[#allocation8 + $0x40] sm:$0xff]
    %v214 = vld [vmem:[#allocation8 + $0x48] sm:$0xff]
    %v215 = vld [vmem:[#allocation8 + $0x50] sm:$0xff]
    %v216 = vld [vmem:[#allocation8 + $0x58] sm:$0xff]
    %v217 = vld [vmem:[#allocation8 + $0x60] sm:$0xff]
    %v218 = vld [vmem:[#allocation8 + $0x68] sm:$0xff]
    %v219 = vld [vmem:[#allocation8 + $0x70] sm:$0xff]
    %v220 = vld [vmem:[#allocation8 + $0x78] sm:$0xff]
    %v221 = vld [vmem:[#allocation10] sm:$0x1]
    %v223 = vlaneseq
    %v224 = vshrl.u32 %v223, 7
    %v225 = vsub.s32 0, %v224
    %v226 = vrot.slane %v221, %v225
    %228 = vmatprep.subr.mxu0 0.0
    %229 = vmatpush1.msra.mxu0 %v205
    %230 = vmatprep.subr.mxu0 0.0
    %231 = vmatpush1.msra.mxu0 %v206
    %232 = vmatprep.subr.mxu0 0.0
    %233 = vmatpush1.msra.mxu0 %v207
    %234 = vmatprep.subr.mxu0 0.0
    %235 = vmatpush1.msra.mxu0 %v208
    %236 = vmatprep.subr.mxu0 0.0
    %237 = vmatpush1.msra.mxu0 %v209
    %238 = vmatprep.subr.mxu0 0.0
    %239 = vmatpush1.msra.mxu0 %v210
    %240 = vmatprep.subr.mxu0 0.0
    %241 = vmatpush1.msra.mxu0 %v211
    %242 = vmatprep.subr.mxu0 0.0
    %243 = vmatpush1.msra.mxu0 %v212
    %244 = vmatprep.subr.mxu0 0.0
    %245 = vmatpush1.msra.mxu0 %v213
    %246 = vmatprep.subr.mxu0 0.0
    %247 = vmatpush1.msra.mxu0 %v214
    %248 = vmatprep.subr.mxu0 0.0
    %249 = vmatpush1.msra.mxu0 %v215
    %250 = vmatprep.subr.mxu0 0.0
    %251 = vmatpush1.msra.mxu0 %v216
    %252 = vmatprep.subr.mxu0 0.0
    %253 = vmatpush1.msra.mxu0 %v217
    %254 = vmatprep.subr.mxu0 0.0
    %255 = vmatpush1.msra.mxu0 %v218
    %256 = vmatprep.subr.mxu0 0.0
    %257 = vmatpush1.msra.mxu0 %v219
    %258 = vmatprep.subr.mxu0 0.0
    %259 = vmatpush1.msra.mxu0 %v220
    %260 = vmatprep.subr.mxu0 0.0
    %261 = vmatpush1.msra.mxu0 0.0
    %262 = vmatprep.subr.mxu0 0.0
    %263 = vmatpush1.msra.mxu0 0.0
    %264 = vmatprep.subr.mxu0 0.0
    %265 = vmatpush1.msra.mxu0 0.0
    %266 = vmatprep.subr.mxu0 0.0
    %267 = vmatpush1.msra.mxu0 0.0
    %268 = vmatprep.subr.mxu0 0.0
    %269 = vmatpush1.msra.mxu0 0.0
    %270 = vmatprep.subr.mxu0 0.0
    %271 = vmatpush1.msra.mxu0 0.0
    %272 = vmatprep.subr.mxu0 0.0
    %273 = vmatpush1.msra.mxu0 0.0
    %274 = vmatprep.subr.mxu0 0.0
    %275 = vmatpush1.msra.mxu0 0.0
    %276 = vmatprep.subr.mxu0 0.0
    %277 = vmatpush1.msra.mxu0 0.0
    %278 = vmatprep.subr.mxu0 0.0
    %279 = vmatpush1.msra.mxu0 0.0
    %280 = vmatprep.subr.mxu0 0.0
    %281 = vmatpush1.msra.mxu0 0.0
    %282 = vmatprep.subr.mxu0 0.0
    %283 = vmatpush1.msra.mxu0 0.0
    %284 = vmatprep.subr.mxu0 0.0
    %285 = vmatpush1.msra.mxu0 0.0
    %286 = vmatprep.subr.mxu0 0.0
    %287 = vmatpush1.msra.mxu0 0.0
    %288 = vmatprep.subr.mxu0 0.0
    %289 = vmatpush1.msra.mxu0 0.0
    %290 = vmatprep.subr.mxu0 0.0
    %291 = vmatpush1.msra.mxu0 0.0
    %292 = vmatprep.mubr.f32.mxu0 0.0
    %293 = vmatmul.mubr.f32.gmra.mrb[0].mxu0 %v203
    %v294 = vpop.f32.mrb[0].mxu0
    %v295 = vadd.f32 %v226, %v294
    %v296 = vpop.f32.mrb[0].mxu0
    %297 = vmatprep.mubr.f32.mxu0 0.0
    %298 = vmatmul.mubr.f32.gmra.mrb[0].mxu0 %v204
    %v299 = vpop.f32.mrb[0].mxu0
    %v300 = vadd.f32 %v226, %v299
    %v301 = vpop.f32.mrb[0].mxu0
    %302 = vdwg.mxu0
    %303 = vst [vmem:[#allocation11] sm:$0xff] %v295
    %304 = vst [vmem:[#allocation11 + $0x8] sm:$0xff] %v300
    // Predicated region
    $region42: #{fine_tune_bert_forward.1} parent=1 // pred_check
      _
    $region43: #{fine_tune_bert_forward.1} parent=1 // pred_check_branch
      %306 = sbr.rel (0) target = $region45
    $region44: #{fine_tune_bert_forward.1} parent=1 // pred_region
      %s308 = ssub.s32 256, 256
      %309 = vsyncadd [#allocation4], %s308
      %s310 = sshll.u32 [#allocation11], 4
      %s311 = int_to_ptr.vmem [resolvable:$true] %s310
      %316 = dma.vmem_to_hbm [thread:$0]  %s311, 256, %s5, [#allocation4], 128, 128, 8
    $region45: #{fine_tune_bert_forward.1} parent=1 // pred_fallthru
      _
    // Predicated region
    $region46: #{fine_tune_bert_forward.1} parent=1 // pred_check
      _
    $region47: #{fine_tune_bert_forward.1} parent=1 // pred_check_branch
      %318 = sbr.rel (0) target = $region49
    $region48: #{fine_tune_bert_forward.1} parent=1 // pred_region
      %319 = dma.done [#allocation4], 256
    $region49: #{fine_tune_bert_forward.1} parent=1 // pred_fallthru
      _
    %320 = vsyncpa [#allocation3], 1
    %321 = vsyncpa [#allocation6], 1
    %322 = vsyncpa [#allocation9], 1
    %323 = vsyncpa [#allocation4], 1

// kernel: fine_tune_bert_forward.1
$region0: #{fine_tune_bert_forward.1}
  #allocation0 [shape = 'u32[]', space=smem, size = 0x4, offset = 0x4, fixed_abs, tag = 'smem constant byte address 0x4 - core index']
  #allocation1 [shape = 'u32[144,128]{1,0:T(1,128)}', space=vmem, size = 0x12000, scoped, tag = 'internal scratch']
  %s0 = inlined_call_operand.hbm [shape: f32[16,256], index: 0, kind: input, shape index: {}]
  %s1 = inlined_call_operand.hbm [shape: f32[256,128], index: 1, kind: input, shape index: {}]
  %s2 = inlined_call_operand.hbm [shape: f32[1,128], index: 2, kind: input, shape index: {}]
  %s3 = inlined_call_operand.hbm [shape: f32[128,128], index: 3, kind: input, shape index: {}]
  %s4 = inlined_call_operand.hbm [shape: f32[1,128], index: 4, kind: input, shape index: {}]
  %s5 = inlined_call_operand.hbm [shape: f32[16,128], index: 5, kind: output, shape index: {}]
  %s6 = sld [smem:[#allocation0]]
  $region50: #{fine_tune_bert_forward.1} parent=0
    _
  %s8 = ssub.s32 1, %s6
  %s9 = scalar_select 0, %s8, %s6
  $region1: #{fine_tune_bert_forward.1} parent=0
    #allocation2 [shape = 'u8[16384]{0}', space=vmem, size = 0x4000, scoped, tag = 'input window, operand 0, single buffered']
    #allocation3 [shape = 's32[1]{0}', space=sflag, size = 0x4, scoped, tag = 'scoped memory for fine_tune_bert_forward.1']
    #allocation4 [shape = 's32[1]{0}', space=sflag, size = 0x4, scoped, tag = 'scoped memory for fine_tune_bert_forward.1']
    #allocation5 [shape = 'u8[131072]{0}', space=vmem, size = 0x20000, scoped, tag = 'input window, operand 1, single buffered']
    #allocation6 [shape = 's32[1]{0}', space=sflag, size = 0x4, scoped, tag = 'scoped memory for fine_tune_bert_forward.1']
    #allocation7 [shape = 'u8[512]{0}', space=vmem, size = 0x400, scoped, tag = 'input window, operand 2, single buffered']
    #allocation8 [shape = 'u8[65536]{0}', space=vmem, size = 0x10000, scoped, tag = 'input window, operand 3, single buffered']
    #allocation9 [shape = 's32[1]{0}', space=sflag, size = 0x4, scoped, tag = 'scoped memory for fine_tune_bert_forward.1']
    #allocation10 [shape = 'u8[512]{0}', space=vmem, size = 0x400, scoped, tag = 'input window, operand 4, single buffered']
    #allocation11 [shape = 'u8[8192]{0}', space=vmem, size = 0x2000, scoped, tag = 'output window, operand 0, single buffered']
    %10 = vsyncpa [#allocation3], 0
    %11 = vsyncpa [#allocation6], 0
    %12 = vsyncpa [#allocation9], 0
    %13 = vsyncpa [#allocation4], 0
    // Predicated region
    $region2: #{fine_tune_bert_forward.1} parent=1 // pred_check
      _
    $region3: #{fine_tune_bert_forward.1} parent=1 // pred_check_branch
      %15 = sbr.rel (0) target = $region5
    $region4: #{fine_tune_bert_forward.1} parent=1 // pred_region
      %s17 = ssub.s32 512, 512
      %18 = vsyncadd [#allocation3], %s17
      %s19 = sshll.u32 [#allocation2], 4
      %s20 = int_to_ptr.vmem [resolvable:$true] %s19
      %25 = dma.hbm_to_vmem [thread:$0]  %s0, 512, %s20, [#allocation3], 256, 256, 16
    $region5: #{fine_tune_bert_forward.1} parent=1 // pred_fallthru
      _
    // Predicated region
    $region6: #{fine_tune_bert_forward.1} parent=1 // pred_check
      _
    $region7: #{fine_tune_bert_forward.1} parent=1 // pred_check_branch
      %27 = sbr.rel (0) target = $region9
    $region8: #{fine_tune_bert_forward.1} parent=1 // pred_region
      %s29 = ssub.s32 4096, 4096
      %30 = vsyncadd [#allocation6], %s29
      %s31 = sshll.u32 [#allocation5], 4
      %s32 = int_to_ptr.vmem [resolvable:$true] %s31
      %37 = dma.hbm_to_vmem [thread:$0]  %s1, 4096, %s32, [#allocation6], 128, 128, 8
    $region9: #{fine_tune_bert_forward.1} parent=1 // pred_fallthru
      _
    // Predicated region
    $region10: #{fine_tune_bert_forward.1} parent=1 // pred_check
      _
    $region11: #{fine_tune_bert_forward.1} parent=1 // pred_check_branch
      %39 = sbr.rel (0) target = $region13
    $region12: #{fine_tune_bert_forward.1} parent=1 // pred_region
      %s41 = ssub.s32 16, 16
      %42 = vsyncadd [#allocation6], %s41
      %s44 = sshll.u32 [#allocation7], 4
      %s45 = int_to_ptr.vmem [resolvable:$true] %s44
      %47 = dma.hbm_to_vmem [thread:$0]  %s2, 16, %s45, [#allocation6]
    $region13: #{fine_tune_bert_forward.1} parent=1 // pred_fallthru
      _
    // Predicated region
    $region14: #{fine_tune_bert_forward.1} parent=1 // pred_check
      _
    $region15: #{fine_tune_bert_forward.1} parent=1 // pred_check_branch
      %49 = sbr.rel (0) target = $region17
    $region16: #{fine_tune_bert_forward.1} parent=1 // pred_region
      %s51 = ssub.s32 2048, 2048
      %52 = vsyncadd [#allocation9], %s51
      %s53 = sshll.u32 [#allocation8], 4
      %s54 = int_to_ptr.vmem [resolvable:$true] %s53
      %59 = dma.hbm_to_vmem [thread:$0]  %s3, 2048, %s54, [#allocation9], 128, 128, 8
    $region17: #{fine_tune_bert_forward.1} parent=1 // pred_fallthru
      _
    // Predicated region
    $region18: #{fine_tune_bert_forward.1} parent=1 // pred_check
      _
    $region19: #{fine_tune_bert_forward.1} parent=1 // pred_check_branch
      %61 = sbr.rel (0) target = $region21
    $region20: #{fine_tune_bert_forward.1} parent=1 // pred_region
      %s63 = ssub.s32 16, 16
      %64 = vsyncadd [#allocation9], %s63
      %s66 = sshll.u32 [#allocation10], 4
      %s67 = int_to_ptr.vmem [resolvable:$true] %s66
      %69 = dma.hbm_to_vmem [thread:$0]  %s4, 16, %s67, [#allocation9]
    $region21: #{fine_tune_bert_forward.1} parent=1 // pred_fallthru
      _
    // Predicated region
    $region22: #{fine_tune_bert_forward.1} parent=1 // pred_check
      _
    $region23: #{fine_tune_bert_forward.1} parent=1 // pred_check_branch
      %71 = sbr.rel (0) target = $region25
    $region24: #{fine_tune_bert_forward.1} parent=1 // pred_region
      %72 = dma.done [#allocation3], 512
    $region25: #{fine_tune_bert_forward.1} parent=1 // pred_fallthru
      _
    // Predicated region
    $region26: #{fine_tune_bert_forward.1} parent=1 // pred_check
      _
    $region27: #{fine_tune_bert_forward.1} parent=1 // pred_check_branch
      %74 = sbr.rel (0) target = $region29
    $region28: #{fine_tune_bert_forward.1} parent=1 // pred_region
      %75 = dma.done [#allocation6], 4096
    $region29: #{fine_tune_bert_forward.1} parent=1 // pred_fallthru
      _
    // Predicated region
    $region30: #{fine_tune_bert_forward.1} parent=1 // pred_check
      _
    $region31: #{fine_tune_bert_forward.1} parent=1 // pred_check_branch
      %77 = sbr.rel (0) target = $region33
    $region32: #{fine_tune_bert_forward.1} parent=1 // pred_region
      %78 = dma.done [#allocation6], 16
    $region33: #{fine_tune_bert_forward.1} parent=1 // pred_fallthru
      _
    // Predicated region
    $region34: #{fine_tune_bert_forward.1} parent=1 // pred_check
      _
    $region35: #{fine_tune_bert_forward.1} parent=1 // pred_check_branch
      %80 = sbr.rel (0) target = $region37
    $region36: #{fine_tune_bert_forward.1} parent=1 // pred_region
      %81 = dma.done [#allocation9], 2048
    $region37: #{fine_tune_bert_forward.1} parent=1 // pred_fallthru
      _
    // Predicated region
    $region38: #{fine_tune_bert_forward.1} parent=1 // pred_check
      _
    $region39: #{fine_tune_bert_forward.1} parent=1 // pred_check_branch
      %83 = sbr.rel (0) target = $region41
    $region40: #{fine_tune_bert_forward.1} parent=1 // pred_region
      %84 = dma.done [#allocation9], 16
    $region41: #{fine_tune_bert_forward.1} parent=1 // pred_fallthru
      _
    %v85 = vld [vmem:[#allocation2] sm:$0xff]
    %v86 = vld [vmem:[#allocation2 + $0x8] sm:$0xff]
    %v87 = vld [vmem:[#allocation2 + $0x10] sm:$0xff]
    %v88 = vld [vmem:[#allocation2 + $0x18] sm:$0xff]
    %v89 = vld [vmem:[#allocation5] sm:$0xff]
    %v90 = vld [vmem:[#allocation5 + $0x8] sm:$0xff]
    %v91 = vld [vmem:[#allocation5 + $0x10] sm:$0xff]
    %v92 = vld [vmem:[#allocation5 + $0x18] sm:$0xff]
    %v93 = vld [vmem:[#allocation5 + $0x20] sm:$0xff]
    %v94 = vld [vmem:[#allocation5 + $0x28] sm:$0xff]
    %v95 = vld [vmem:[#allocation5 + $0x30] sm:$0xff]
    %v96 = vld [vmem:[#allocation5 + $0x38] sm:$0xff]
    %v97 = vld [vmem:[#allocation5 + $0x40] sm:$0xff]
    %v98 = vld [vmem:[#allocation5 + $0x48] sm:$0xff]
    %v99 = vld [vmem:[#allocation5 + $0x50] sm:$0xff]
    %v100 = vld [vmem:[#allocation5 + $0x58] sm:$0xff]
    %v101 = vld [vmem:[#allocation5 + $0x60] sm:$0xff]
    %v102 = vld [vmem:[#allocation5 + $0x68] sm:$0xff]
    %v103 = vld [vmem:[#allocation5 + $0x70] sm:$0xff]
    %v104 = vld [vmem:[#allocation5 + $0x78] sm:$0xff]
    %v105 = vld [vmem:[#allocation5 + $0x80] sm:$0xff]
    %v106 = vld [vmem:[#allocation5 + $0x88] sm:$0xff]
    %v107 = vld [vmem:[#allocation5 + $0x90] sm:$0xff]
    %v108 = vld [vmem:[#allocation5 + $0x98] sm:$0xff]
    %v109 = vld [vmem:[#allocation5 + $0xa0] sm:$0xff]
    %v110 = vld [vmem:[#allocation5 + $0xa8] sm:$0xff]
    %v111 = vld [vmem:[#allocation5 + $0xb0] sm:$0xff]
    %v112 = vld [vmem:[#allocation5 + $0xb8] sm:$0xff]
    %v113 = vld [vmem:[#allocation5 + $0xc0] sm:$0xff]
    %v114 = vld [vmem:[#allocation5 + $0xc8] sm:$0xff]
    %v115 = vld [vmem:[#allocation5 + $0xd0] sm:$0xff]
    %v116 = vld [vmem:[#allocation5 + $0xd8] sm:$0xff]
    %v117 = vld [vmem:[#allocation5 + $0xe0] sm:$0xff]
    %v118 = vld [vmem:[#allocation5 + $0xe8] sm:$0xff]
    %v119 = vld [vmem:[#allocation5 + $0xf0] sm:$0xff]
    %v120 = vld [vmem:[#allocation5 + $0xf8] sm:$0xff]
    %v121 = vld [vmem:[#allocation7] sm:$0x1]
    %v123 = vlaneseq
    %v124 = vshrl.u32 %v123, 7
    %v125 = vsub.s32 0, %v124
    %v126 = vrot.slane %v121, %v125
    %128 = vmatprep.subr.mxu0 0.0
    %129 = vmatpush1.msra.mxu0 %v89
    %130 = vmatprep.subr.mxu0 0.0
    %131 = vmatpush1.msra.mxu0 %v90
    %132 = vmatprep.subr.mxu0 0.0
    %133 = vmatpush1.msra.mxu0 %v91
    %134 = vmatprep.subr.mxu0 0.0
    %135 = vmatpush1.msra.mxu0 %v92
    %136 = vmatprep.subr.mxu0 0.0
    %137 = vmatpush1.msra.mxu0 %v93
    %138 = vmatprep.subr.mxu0 0.0
    %139 = vmatpush1.msra.mxu0 %v94
    %140 = vmatprep.subr.mxu0 0.0
    %141 = vmatpush1.msra.mxu0 %v95
    %142 = vmatprep.subr.mxu0 0.0
    %143 = vmatpush1.msra.mxu0 %v96
    %144 = vmatprep.subr.mxu0 0.0
    %145 = vmatpush1.msra.mxu0 %v97
    %146 = vmatprep.subr.mxu0 0.0
    %147 = vmatpush1.msra.mxu0 %v98
    %148 = vmatprep.subr.mxu0 0.0
    %149 = vmatpush1.msra.mxu0 %v99
    %150 = vmatprep.subr.mxu0 0.0
    %151 = vmatpush1.msra.mxu0 %v100
    %152 = vmatprep.subr.mxu0 0.0
    %153 = vmatpush1.msra.mxu0 %v101
    %154 = vmatprep.subr.mxu0 0.0
    %155 = vmatpush1.msra.mxu0 %v102
    %156 = vmatprep.subr.mxu0 0.0
    %157 = vmatpush1.msra.mxu0 %v103
    %158 = vmatprep.subr.mxu0 0.0
    %159 = vmatpush1.msra.mxu0 %v104
    %160 = vmatprep.subr.mxu0 0.0
    %161 = vmatpush1.msra.mxu0 %v105
    %162 = vmatprep.subr.mxu0 0.0
    %163 = vmatpush1.msra.mxu0 %v106
    %164 = vmatprep.subr.mxu0 0.0
    %165 = vmatpush1.msra.mxu0 %v107
    %166 = vmatprep.subr.mxu0 0.0
    %167 = vmatpush1.msra.mxu0 %v108
    %168 = vmatprep.subr.mxu0 0.0
    %169 = vmatpush1.msra.mxu0 %v109
    %170 = vmatprep.subr.mxu0 0.0
    %171 = vmatpush1.msra.mxu0 %v110
    %172 = vmatprep.subr.mxu0 0.0
    %173 = vmatpush1.msra.mxu0 %v111
    %174 = vmatprep.subr.mxu0 0.0
    %175 = vmatpush1.msra.mxu0 %v112
    %176 = vmatprep.subr.mxu0 0.0
    %177 = vmatpush1.msra.mxu0 %v113
    %178 = vmatprep.subr.mxu0 0.0
    %179 = vmatpush1.msra.mxu0 %v114
    %180 = vmatprep.subr.mxu0 0.0
    %181 = vmatpush1.msra.mxu0 %v115
    %182 = vmatprep.subr.mxu0 0.0
    %183 = vmatpush1.msra.mxu0 %v116
    %184 = vmatprep.subr.mxu0 0.0
    %185 = vmatpush1.msra.mxu0 %v117
    %186 = vmatprep.subr.mxu0 0.0
    %187 = vmatpush1.msra.mxu0 %v118
    %188 = vmatprep.subr.mxu0 0.0
    %189 = vmatpush1.msra.mxu0 %v119
    %190 = vmatprep.subr.mxu0 0.0
    %191 = vmatpush1.msra.mxu0 %v120
    %192 = vmatprep.mubr.f32.mxu0 %v86
    %193 = vmatmul.mubr.f32.gmra.mrb[0].mxu0 %v85
    %v194 = vpop.f32.mrb[0].mxu0
    %v195 = vadd.f32 %v126, %v194
    %v196 = vpop.f32.mrb[0].mxu0
    %197 = vmatprep.mubr.f32.mxu0 %v88
    %198 = vmatmul.mubr.f32.gmra.mrb[0].mxu0 %v87
    %v199 = vpop.f32.mrb[0].mxu0
    %v200 = vadd.f32 %v126, %v199
    %v201 = vpop.f32.mrb[0].mxu0
    %202 = vdwg.mxu0
    %v203 = vmax.f32 %v195, 0.0
    %v204 = vmax.f32 %v200, 0.0
    %v205 = vld [vmem:[#allocation8] sm:$0xff]
    %v206 = vld [vmem:[#allocation8 + $0x8] sm:$0xff]
    %v207 = vld [vmem:[#allocation8 + $0x10] sm:$0xff]
    %v208 = vld [vmem:[#allocation8 + $0x18] sm:$0xff]
    %v209 = vld [vmem:[#allocation8 + $0x20] sm:$0xff]
    %v210 = vld [vmem:[#allocation8 + $0x28] sm:$0xff]
    %v211 = vld [vmem:[#allocation8 + $0x30] sm:$0xff]
    %v212 = vld [vmem:[#allocation8 + $0x38] sm:$0xff]
    %v213 = vld [vmem:[#allocation8 + $0x40] sm:$0xff]
    %v214 = vld [vmem:[#allocation8 + $0x48] sm:$0xff]
    %v215 = vld [vmem:[#allocation8 + $0x50] sm:$0xff]
    %v216 = vld [vmem:[#allocation8 + $0x58] sm:$0xff]
    %v217 = vld [vmem:[#allocation8 + $0x60] sm:$0xff]
    %v218 = vld [vmem:[#allocation8 + $0x68] sm:$0xff]
    %v219 = vld [vmem:[#allocation8 + $0x70] sm:$0xff]
    %v220 = vld [vmem:[#allocation8 + $0x78] sm:$0xff]
    %v221 = vld [vmem:[#allocation10] sm:$0x1]
    %v223 = vlaneseq
    %v224 = vshrl.u32 %v223, 7
    %v225 = vsub.s32 0, %v224
    %v226 = vrot.slane %v221, %v225
    %228 = vmatprep.subr.mxu0 0.0
    %229 = vmatpush1.msra.mxu0 %v205
    %230 = vmatprep.subr.mxu0 0.0
    %231 = vmatpush1.msra.mxu0 %v206
    %232 = vmatprep.subr.mxu0 0.0
    %233 = vmatpush1.msra.mxu0 %v207
    %234 = vmatprep.subr.mxu0 0.0
    %235 = vmatpush1.msra.mxu0 %v208
    %236 = vmatprep.subr.mxu0 0.0
    %237 = vmatpush1.msra.mxu0 %v209
    %238 = vmatprep.subr.mxu0 0.0
    %239 = vmatpush1.msra.mxu0 %v210
    %240 = vmatprep.subr.mxu0 0.0
    %241 = vmatpush1.msra.mxu0 %v211
    %242 = vmatprep.subr.mxu0 0.0
    %243 = vmatpush1.msra.mxu0 %v212
    %244 = vmatprep.subr.mxu0 0.0
    %245 = vmatpush1.msra.mxu0 %v213
    %246 = vmatprep.subr.mxu0 0.0
    %247 = vmatpush1.msra.mxu0 %v214
    %248 = vmatprep.subr.mxu0 0.0
    %249 = vmatpush1.msra.mxu0 %v215
    %250 = vmatprep.subr.mxu0 0.0
    %251 = vmatpush1.msra.mxu0 %v216
    %252 = vmatprep.subr.mxu0 0.0
    %253 = vmatpush1.msra.mxu0 %v217
    %254 = vmatprep.subr.mxu0 0.0
    %255 = vmatpush1.msra.mxu0 %v218
    %256 = vmatprep.subr.mxu0 0.0
    %257 = vmatpush1.msra.mxu0 %v219
    %258 = vmatprep.subr.mxu0 0.0
    %259 = vmatpush1.msra.mxu0 %v220
    %260 = vmatprep.subr.mxu0 0.0
    %261 = vmatpush1.msra.mxu0 0.0
    %262 = vmatprep.subr.mxu0 0.0
    %263 = vmatpush1.msra.mxu0 0.0
    %264 = vmatprep.subr.mxu0 0.0
    %265 = vmatpush1.msra.mxu0 0.0
    %266 = vmatprep.subr.mxu0 0.0
    %267 = vmatpush1.msra.mxu0 0.0
    %268 = vmatprep.subr.mxu0 0.0
    %269 = vmatpush1.msra.mxu0 0.0
    %270 = vmatprep.subr.mxu0 0.0
    %271 = vmatpush1.msra.mxu0 0.0
    %272 = vmatprep.subr.mxu0 0.0
    %273 = vmatpush1.msra.mxu0 0.0
    %274 = vmatprep.subr.mxu0 0.0
    %275 = vmatpush1.msra.mxu0 0.0
    %276 = vmatprep.subr.mxu0 0.0
    %277 = vmatpush1.msra.mxu0 0.0
    %278 = vmatprep.subr.mxu0 0.0
    %279 = vmatpush1.msra.mxu0 0.0
    %280 = vmatprep.subr.mxu0 0.0
    %281 = vmatpush1.msra.mxu0 0.0
    %282 = vmatprep.subr.mxu0 0.0
    %283 = vmatpush1.msra.mxu0 0.0
    %284 = vmatprep.subr.mxu0 0.0
    %285 = vmatpush1.msra.mxu0 0.0
    %286 = vmatprep.subr.mxu0 0.0
    %287 = vmatpush1.msra.mxu0 0.0
    %288 = vmatprep.subr.mxu0 0.0
    %289 = vmatpush1.msra.mxu0 0.0
    %290 = vmatprep.subr.mxu0 0.0
    %291 = vmatpush1.msra.mxu0 0.0
    %292 = vmatprep.mubr.f32.mxu0 0.0
    %293 = vmatmul.mubr.f32.gmra.mrb[0].mxu0 %v203
    %v294 = vpop.f32.mrb[0].mxu0
    %v295 = vadd.f32 %v226, %v294
    %v296 = vpop.f32.mrb[0].mxu0
    %297 = vmatprep.mubr.f32.mxu0 0.0
    %298 = vmatmul.mubr.f32.gmra.mrb[0].mxu0 %v204
    %v299 = vpop.f32.mrb[0].mxu0
    %v300 = vadd.f32 %v226, %v299
    %v301 = vpop.f32.mrb[0].mxu0
    %302 = vdwg.mxu0
    %303 = vst [vmem:[#allocation11] sm:$0xff] %v295
    %304 = vst [vmem:[#allocation11 + $0x8] sm:$0xff] %v300
    // Predicated region
    $region42: #{fine_tune_bert_forward.1} parent=1 // pred_check
      _
    $region43: #{fine_tune_bert_forward.1} parent=1 // pred_check_branch
      %306 = sbr.rel (0) target = $region45
    $region44: #{fine_tune_bert_forward.1} parent=1 // pred_region
      %s308 = ssub.s32 256, 256
      %309 = vsyncadd [#allocation4], %s308
      %s310 = sshll.u32 [#allocation11], 4
      %s311 = int_to_ptr.vmem [resolvable:$true] %s310
      %316 = dma.vmem_to_hbm [thread:$0]  %s311, 256, %s5, [#allocation4], 128, 128, 8
    $region45: #{fine_tune_bert_forward.1} parent=1 // pred_fallthru
      _
    // Predicated region
    $region46: #{fine_tune_bert_forward.1} parent=1 // pred_check
      _
    $region47: #{fine_tune_bert_forward.1} parent=1 // pred_check_branch
      %318 = sbr.rel (0) target = $region49
    $region48: #{fine_tune_bert_forward.1} parent=1 // pred_region
      %319 = dma.done [#allocation4], 256
    $region49: #{fine_tune_bert_forward.1} parent=1 // pred_fallthru
      _
    %320 = vsyncpa [#allocation3], 1
    %321 = vsyncpa [#allocation6], 1
    %322 = vsyncpa [#allocation9], 1
    %323 = vsyncpa [#allocation4], 1

</llo_original>
